<compile_context>
chip_gen: v7x
topology: tpu7x:2x2x1
jax: 0.10.0
libtpu: 0.0.40
codegen_flags: <defaults>
</compile_context>

<pallas_src>
import jax
import jax.numpy as jnp
from jax.experimental import pallas as pl
from jax.experimental.pallas import tpu as pltpu


# ---------------------------------------------------------------------------
# Kernels
# ---------------------------------------------------------------------------
def _identity_single_dma_kernel(x_hbm_ref, o_hbm_ref, copy_sem):
    """Whole-array HBM -> HBM async copy; wait before returning."""
    cp = pltpu.make_async_copy(x_hbm_ref, o_hbm_ref, copy_sem)
    cp.start()
    cp.wait()


def _make_chunked_dma_kernel(num_chunks, chunk_rows):
    """K concurrent chunk DMAs along axis 0: start all, then wait on all."""

    def kernel(x_hbm_ref, o_hbm_ref, copy_sems):
        copies = []
        # Start every chunk's DMA before waiting on any (start-all/wait-all):
        # serial start/wait would throw away the concurrency the split buys.
        for c in range(num_chunks):
            rows = pl.ds(c * chunk_rows, chunk_rows)
            cp = pltpu.make_async_copy(
                x_hbm_ref.at[rows], o_hbm_ref.at[rows], copy_sems.at[c]
            )
            cp.start()
            copies.append(cp)
        for cp in copies:
            cp.wait()

    return kernel


# ---------------------------------------------------------------------------
# Wrapper
# ---------------------------------------------------------------------------
_TINY_BYTES = 256 * 1024          # below this: skip Pallas, launch cost dominates
_CHUNK_BYTES = 16 * 1024 * 1024   # at/above this: split into concurrent DMAs
_MAX_CHUNKS = 8


def identity(x, *, force_pallas=False, min_chunk_bytes=_CHUNK_BYTES):
    """Pallas identity: returns an array equal to x (same shape/dtype).

    force_pallas:    always run the Pallas copy kernel (used by the test so the
                     tiny-input fast path does not hide the kernel).
    min_chunk_bytes: byte threshold above which the copy is split into
                     concurrent chunk DMAs (static, shape-dependent).
    """
    nbytes = x.size * jnp.dtype(x.dtype).itemsize

    # Tiny-input fast path: the fixed pallas_call launch overhead (~1-2 us)
    # is orders of magnitude larger than the copy itself. This is also the
    # zero-HBM-traffic "donated" path: identity simply hands back the buffer.
    if not force_pallas and nbytes <= _TINY_BYTES:
        return x

    # Pick a static chunk count (row-aligned split along the leading axis).
    num_chunks = 1
    if x.ndim >= 1 and nbytes >= min_chunk_bytes:
        for k in (_MAX_CHUNKS, 4, 2):
            if x.shape[0] % k == 0 and x.shape[0] >= k:
                num_chunks = k
                break

    if num_chunks == 1:
        kernel = _identity_single_dma_kernel
        sem_spec = pltpu.SemaphoreType.DMA(())
    else:
        kernel = _make_chunked_dma_kernel(num_chunks, x.shape[0] // num_chunks)
        sem_spec = pltpu.SemaphoreType.DMA((num_chunks,))

    return pl.pallas_call(
        kernel,
        out_shape=jax.ShapeDtypeStruct(x.shape, x.dtype),
        # Leave both input and output in HBM; the kernel drives the DMA itself.
        in_specs=[pl.BlockSpec(memory_space=pl.ANY)],
        out_specs=pl.BlockSpec(memory_space=pl.ANY),
        scratch_shapes=[sem_spec],
    )(x)


# ---------------------------------------------------------------------------
# Test
# ---------------------------------------------------------------------------
if __name__ == "__main__":
    key = jax.random.PRNGKey(0)
    x = jax.random.normal(key, (2, 4, 16, 16), dtype=jnp.float32)

    # Default path (tiny input -> returns x directly).
    y_fast = identity(x)
    jax.block_until_ready(y_fast)
    assert y_fast.shape == x.shape and y_fast.dtype == x.dtype
    assert bool(jnp.array_equal(y_fast, x))

    # Single whole-array DMA kernel path.
    y_single = identity(x, force_pallas=True)
    jax.block_until_ready(y_single)
    assert y_single.shape == x.shape and y_single.dtype == x.dtype
    assert bool(jnp.array_equal(y_single, x))

    # Chunked concurrent-DMA kernel path (threshold lowered so the small test
    # tensor exercises it; splits into 2 chunks along axis 0).
    y_chunked = identity(x, force_pallas=True, min_chunk_bytes=0)
    jax.block_until_ready(y_chunked)
    assert y_chunked.shape == x.shape and y_chunked.dtype == x.dtype
    assert bool(jnp.array_equal(y_chunked, x))

    print("KERNEL_OK")
</pallas_src>

<mosaic_0001>
module attributes {stable_mosaic.version = 11 : i64} {
  func.func @_identity_single_dma_kernel(%arg0: memref<2x4x16x16xf32, #tpu.memory_space<any>>, %arg1: memref<2x4x16x16xf32, #tpu.memory_space<any>>, %arg2: memref<!tpu.dma_semaphore, #tpu.memory_space<semaphore_mem>>) attributes {dimension_semantics = [], scalar_prefetch = 0 : i64, scratch_operands = 1 : i64, tpu.core_type = #tpu.core_type<tc>} {
    tpu.enqueue_dma source(%arg0 : memref<2x4x16x16xf32, #tpu.memory_space<any>>) target(%arg1 : memref<2x4x16x16xf32, #tpu.memory_space<any>>) target_semaphore(%arg2 : memref<!tpu.dma_semaphore, #tpu.memory_space<semaphore_mem>>)
    tpu.wait_dma2 semaphore(%arg2 : memref<!tpu.dma_semaphore, #tpu.memory_space<semaphore_mem>>) src(%arg0 : memref<2x4x16x16xf32, #tpu.memory_space<any>>) dst(%arg1 : memref<2x4x16x16xf32, #tpu.memory_space<any>>)
    return
  }
}

</mosaic_0001>

<llo_original>
// kernel: tpu_custom_call.1
$region0: #{tpu_custom_call.1}
  #allocation0 [shape = 'u32[]', space=smem, size = 0x4, offset = 0x4, fixed_abs, tag = 'smem constant byte address 0x4 - core index']
  #allocation1 [shape = 'u32[144,128]{1,0:T(1,128)}', space=vmem, size = 0x12000, scoped, tag = 'internal scratch']
  #allocation2 [shape = 's32[1]{0}', space=sflag, size = 0x4, scoped, tag = 'scratch operand']
  #allocation3 [shape = 's32[]', space=sflag, size = 0x4, offset = 0, fixed_abs, tag = 'sflag constant byte address 0x0 - dummy sync flag']
  #allocation4 [shape = 'u32[0]{0}', space=smem, size = 0, offset = 0, fixed_abs, tag = 'smem constant byte address 0x0 - null']
  %s0 = inlined_call_operand.hbm [shape: f32[2,4,16,16], index: 0, kind: input, shape index: {}]
  %s1 = inlined_call_operand.hbm [shape: f32[2,4,16,16], index: 1, kind: output, shape index: {}]
  %s2 = sld [smem:[#allocation0]]
  $region2: #{tpu_custom_call.1} parent=0
    _
  %s4 = ssub.s32 1, %s2
  %s5 = scalar_select 0, %s4, %s2
  %s7 = sshll.u32 1, 14
  %s8 = sxor.u32 4294967295, %s7
  %s11 = sshll.u32 3, 24
  %s12 = sxor.u32 4294967295, %s11
  %s13 = sand.u32 0, %s12
  %s15 = sor.u32 %s13, 0
  %18 = dma.general %s0, 2048, %s1, [#allocation2], [#allocation3], [#allocation4], %s15, 0
  %s19 = smul.u32 2, 4
  %s20 = smul.u32 %s19, 16
  %s21 = smul.u32 %s20, 1
  %s22 = sshll.u32 %s21, 4
  %23 = dma.done [#allocation2], %s22
  %24 = vsyncmov [#allocation2]
  %s25 = vpop.sfrf %24
  %p26 = scmp.eq.s32.totalorder %s25, 0
  %p27 = pneg %p26
  %29 = shalt.err (%p27)

</llo_original>
